<compile_context>
chip_gen: v6e
topology: v6e:2x2x1
jax: 0.10.0
libtpu: 0.0.40
codegen_flags: <defaults>
</compile_context>

<pallas_src>
import functools

import jax
import jax.numpy as jnp
from jax.experimental import pallas as pl
from jax.experimental.pallas import tpu as pltpu


def _channel_attention_kernel(x_ref, w1_ref, b1_ref, w2_ref, b2_ref, ca_ref,
                              sum_acc, max_acc, *, hw_total):
    """One grid step.  Grid = (B tiles, HW tiles).

    x_ref   : (B_T, C, HW_T)   streamed input tile
    w1_ref  : (C, HID_PAD)     first Linear weight, stored (in, out), zero-padded
    b1_ref  : (1, HID_PAD)
    w2_ref  : (HID_PAD, C)     second Linear weight, stored (in, out), zero-padded
    b2_ref  : (1, C)
    ca_ref  : (B_T, C)         sigmoid gate output
    sum_acc : (B_T, C)         f32 scratch (running spatial sum)
    max_acc : (B_T, C)         f32 scratch (running spatial max)
    """
    k = pl.program_id(1)
    nk = pl.num_programs(1)

    @pl.when(k == 0)
    def _init():
        sum_acc[...] = jnp.zeros_like(sum_acc)
        max_acc[...] = jnp.full_like(max_acc, -jnp.inf)

    x = x_ref[...].astype(jnp.float32)        # (B_T, C, HW_T)
    hw_tile = x.shape[-1]
    ragged = (hw_total % hw_tile) != 0

    def _accumulate(x_sum, x_max):
        # Per-step lane-reduce to (B_T, C): scratch stays tiny, so no full-tile
        # scratch loads/stores per step (review opt #1).
        sum_acc[...] = sum_acc[...] + jnp.sum(x_sum, axis=-1)
        max_acc[...] = jnp.maximum(max_acc[...], jnp.max(x_max, axis=-1))

    if ragged:
        # Mask (iota + compares + 2 selects) only on the final, ragged tile;
        # all steady-state tiles accumulate unmasked (review opt #2).
        @pl.when(k < nk - 1)
        def _steady():
            _accumulate(x, x)

        @pl.when(k == nk - 1)
        def _tail():
            lane = jax.lax.broadcasted_iota(jnp.int32, x.shape, 2)
            valid = (k * hw_tile + lane) < hw_total
            _accumulate(jnp.where(valid, x, 0.0),
                        jnp.where(valid, x, -jnp.inf))
    else:
        _accumulate(x, x)

    @pl.when(k == nk - 1)
    def _epilogue():
        avg = sum_acc[...] * (1.0 / hw_total)   # (B_T, C) mean over true H*W
        mx = max_acc[...]                       # (B_T, C)
        b_t = avg.shape[0]

        w1 = w1_ref[...].astype(jnp.float32)
        b1 = b1_ref[...].astype(jnp.float32)
        w2 = w2_ref[...].astype(jnp.float32)
        b2 = b2_ref[...].astype(jnp.float32)

        # Shared MLP on both pooled vectors: one stacked matmul for layer 1,
        # fused affine layer 2:
        #   mlp(avg) + mlp(mx) = (relu(avg@W1+b1) + relu(mx@W1+b1)) @ W2 + 2*b2
        pooled = jnp.concatenate([avg, mx], axis=0)            # (2*B_T, C)
        h = jnp.maximum(
            jnp.dot(pooled, w1, preferred_element_type=jnp.float32) + b1, 0.0)
        h_sum = h[:b_t] + h[b_t:]                              # (B_T, HID_PAD)
        y = jnp.dot(h_sum, w2, preferred_element_type=jnp.float32) + 2.0 * b2
        ca_ref[...] = jax.nn.sigmoid(y).astype(ca_ref.dtype)


def channel_attention(x, w1, b1, w2, b2, *, b_tile=None, hw_tile=None):
    """CBAM channel-attention gate.

    x  : (B, C, H, W)
    w1 : (C, C//r)   first Linear weight, stored (in, out)
    b1 : (C//r,)
    w2 : (C//r, C)   second Linear weight, stored (in, out)
    b2 : (C,)
    Returns the sigmoid gate of shape (B, C, 1, 1) in x.dtype.
    """
    b, c, h, w = x.shape
    hw = h * w
    hid = w1.shape[1]

    # Pad the tiny hidden dim up to a 128-lane multiple (zero pads keep the
    # math identical: relu(0) = 0 contributes nothing through zero W2 rows).
    hid_pad = max(128, ((hid + 127) // 128) * 128)
    w1p = jnp.pad(w1, ((0, 0), (0, hid_pad - hid)))
    b1p = jnp.pad(b1.reshape(1, hid), ((0, 0), (0, hid_pad - hid)))
    w2p = jnp.pad(w2, ((0, hid_pad - hid), (0, 0)))
    b2p = b2.reshape(1, c)

    # --- tile selection -----------------------------------------------------
    # Output block is (B_T, C): B_T must equal B or be a multiple of 8.
    if b_tile is None:
        b_tile = 8 if (b % 8 == 0) else b
    assert b % b_tile == 0, (b, b_tile)

    itemsize = x.dtype.itemsize
    # x block is (B_T, C, HW_T): HW_T must be a multiple of 128 or equal HW
    # (ragged last tile handled by in-kernel masking).  Target ~4 MiB per
    # streamed block: with only tiny (B_T, C) scratch, 2x double-buffered
    # input blocks stay comfortably under 16 MiB (v5e) / 32 MiB (v6e, v7x)
    # default scoped-VMEM limits.  Clamp to HW so a single block never reads
    # past the array.
    if hw_tile is None:
        target_bytes = 4 << 20
        lanes = target_bytes // (b_tile * c * itemsize)
        lanes = max(128, (lanes // 128) * 128)
        hw_tile = hw if lanes >= hw else int(lanes)
    assert hw_tile == hw or hw_tile % 128 == 0, hw_tile

    x_flat = x.reshape(b, c, hw)
    grid = (b // b_tile, pl.cdiv(hw, hw_tile))

    block_bytes = b_tile * c * hw_tile * itemsize
    # Explicit scoped-VMEM budget: double-buffered input + weights + margin,
    # capped at 32 MiB so it fits every generation (v7x physical is 64 MiB).
    vmem_limit = int(min(32 << 20, max(16 << 20, 2 * block_bytes + (2 << 20))))

    cost = pl.CostEstimate(
        flops=int(2 * b * c * hw + 4 * b * c * hid_pad),
        transcendentals=int(b * c),
        bytes_accessed=int(x_flat.size * itemsize
                           + (w1p.size + b1p.size + w2p.size + b2p.size)
                           * w1p.dtype.itemsize
                           + b * c * itemsize),
    )

    kernel = functools.partial(_channel_attention_kernel, hw_total=hw)

    ca = pl.pallas_call(
        kernel,
        out_shape=jax.ShapeDtypeStruct((b, c), x.dtype),
        grid=grid,
        in_specs=[
            pl.BlockSpec((b_tile, c, hw_tile), lambda bi, k: (bi, 0, k)),
            pl.BlockSpec((c, hid_pad), lambda bi, k: (0, 0)),
            pl.BlockSpec((1, hid_pad), lambda bi, k: (0, 0)),
            pl.BlockSpec((hid_pad, c), lambda bi, k: (0, 0)),
            pl.BlockSpec((1, c), lambda bi, k: (0, 0)),
        ],
        out_specs=pl.BlockSpec((b_tile, c), lambda bi, k: (bi, 0)),
        scratch_shapes=[
            pltpu.VMEM((b_tile, c), jnp.float32),  # running spatial sum
            pltpu.VMEM((b_tile, c), jnp.float32),  # running spatial max
        ],
        compiler_params=pltpu.CompilerParams(
            # B tiles are independent (shardable across v7x's 2 TensorCores);
            # the spatial axis is a sequential reduction, kept last.
            dimension_semantics=("parallel", "arbitrary"),
            vmem_limit_bytes=vmem_limit,
        ),
        cost_estimate=cost,
    )(x_flat, w1p, b1p, w2p, b2p)

    return ca.reshape(b, c, 1, 1)


def reference(x, w1, b1, w2, b2):
    """Pure-JAX reference mirroring the PyTorch forward."""
    b, c, h, w = x.shape
    avg = jnp.mean(x, axis=(2, 3))
    mx = jnp.max(x, axis=(2, 3))

    def mlp(v):
        h1 = jnp.maximum(v @ w1 + b1, 0.0)
        return h1 @ w2 + b2

    return jax.nn.sigmoid(mlp(avg) + mlp(mx)).reshape(b, c, 1, 1)


if __name__ == "__main__":
    B, C, H, W = 2, 32, 16, 16
    reduction = 16
    HID = C // reduction  # = 2

    key = jax.random.PRNGKey(0)
    kx, kw1, kb1, kw2, kb2 = jax.random.split(key, 5)

    x = jax.random.normal(kx, (B, C, H, W), dtype=jnp.float32)
    # PyTorch Linear weights are (out, in); stored here transposed as
    # (in, out) for the kernel's v @ W convention.
    w1 = jax.random.normal(kw1, (C, HID), dtype=jnp.float32) * 0.1
    b1 = jax.random.normal(kb1, (HID,), dtype=jnp.float32) * 0.1
    w2 = jax.random.normal(kw2, (HID, C), dtype=jnp.float32) * 0.1
    b2 = jax.random.normal(kb2, (C,), dtype=jnp.float32) * 0.1

    # Multi-tile spatial axis (HW=256 -> 2 tiles of 128) exercises the
    # pipelined grid accumulation path even at this small demo size.
    ca = channel_attention(x, w1, b1, w2, b2, hw_tile=128)
    ca = jax.block_until_ready(ca)
    ref = reference(x, w1, b1, w2, b2)
    assert ca.shape == (B, C, 1, 1), ca.shape
    assert jnp.allclose(ca, ref, atol=1e-5, rtol=1e-5), (
        float(jnp.max(jnp.abs(ca - ref))))

    # Ragged spatial tail (HW = 18*18 = 324 = 2*128 + 68) exercises the
    # last-tile-only masking path (0 for sum, -inf for max, divide by true HW).
    x2 = jax.random.normal(kx, (B, C, 18, 18), dtype=jnp.float32)
    ca2 = jax.block_until_ready(
        channel_attention(x2, w1, b1, w2, b2, hw_tile=128))
    ref2 = reference(x2, w1, b1, w2, b2)
    assert jnp.allclose(ca2, ref2, atol=1e-5, rtol=1e-5), (
        float(jnp.max(jnp.abs(ca2 - ref2))))

    print("KERNEL_OK")
</pallas_src>

<mosaic_0001>
module attributes {stable_mosaic.version = 11 : i64} {
  func.func @_channel_attention_kernel(%arg0: i32, %arg1: i32, %arg2: memref<2x32x128xf32, #tpu.memory_space<vmem>>, %arg3: memref<32x128xf32, #tpu.memory_space<vmem>>, %arg4: memref<1x128xf32, #tpu.memory_space<vmem>>, %arg5: memref<128x32xf32, #tpu.memory_space<vmem>>, %arg6: memref<1x32xf32, #tpu.memory_space<vmem>>, %arg7: memref<2x32xf32, #tpu.memory_space<vmem>>, %arg8: memref<2x32xf32, #tpu.memory_space<vmem>>, %arg9: memref<2x32xf32, #tpu.memory_space<vmem>>) attributes {dimension_semantics = [#tpu.dimension_semantics<parallel>, #tpu.dimension_semantics<arbitrary>], iteration_bounds = array<i64: 1, 2>, scalar_prefetch = 0 : i64, scratch_operands = 2 : i64, tpu.core_type = #tpu.core_type<tc>, window_params = [{transform_indices = @transform_0, window_bounds = array<i64: 2, 32, 128>}, {pipeline_mode = #tpu.pipeline_mode<synchronous>, transform_indices = @transform_1, window_bounds = array<i64: 32, 128>}, {pipeline_mode = #tpu.pipeline_mode<synchronous>, transform_indices = @transform_2, window_bounds = array<i64: 1, 128>}, {pipeline_mode = #tpu.pipeline_mode<synchronous>, transform_indices = @transform_3, window_bounds = array<i64: 128, 32>}, {pipeline_mode = #tpu.pipeline_mode<synchronous>, transform_indices = @transform_4, window_bounds = array<i64: 1, 32>}, {transform_indices = @transform_5, window_bounds = array<i64: 2, 32>}]} {
    %c0_i32 = arith.constant 0 : i32
    %0 = arith.cmpi eq, %arg1, %c0_i32 : i32
    %1 = arith.extui %0 : i1 to i32
    %c0_i32_0 = arith.constant 0 : i32
    %2 = arith.cmpi ne, %1, %c0_i32_0 : i32
    scf.if %2 {
      %cst_13 = arith.constant 0.000000e+00 : f32
      %15 = vector.broadcast %cst_13 : f32 to vector<2x32xf32>
      %c0_14 = arith.constant 0 : index
      %c0_15 = arith.constant 0 : index
      %16 = vector.load %arg8[%c0_14, %c0_15] : memref<2x32xf32, #tpu.memory_space<vmem>>, vector<2x32xf32>
      tpu.vector_store %arg8[%c0_14, %c0_15], %15 {strides = array<i32>} : memref<2x32xf32, #tpu.memory_space<vmem>>, vector<2x32xf32>,
      %cst_16 = arith.constant 0xFF800000 : f32
      %17 = vector.broadcast %cst_16 : f32 to vector<2x32xf32>
      %c0_17 = arith.constant 0 : index
      %c0_18 = arith.constant 0 : index
      %18 = vector.load %arg9[%c0_17, %c0_18] : memref<2x32xf32, #tpu.memory_space<vmem>>, vector<2x32xf32>
      tpu.vector_store %arg9[%c0_17, %c0_18], %17 {strides = array<i32>} : memref<2x32xf32, #tpu.memory_space<vmem>>, vector<2x32xf32>,
    } else {
    }
    %c0 = arith.constant 0 : index
    %c0_1 = arith.constant 0 : index
    %c0_2 = arith.constant 0 : index
    %3 = vector.load %arg2[%c0, %c0_1, %c0_2] : memref<2x32x128xf32, #tpu.memory_space<vmem>>, vector<2x32x128xf32>
    %c0_3 = arith.constant 0 : index
    %c0_4 = arith.constant 0 : index
    %4 = vector.load %arg8[%c0_3, %c0_4] : memref<2x32xf32, #tpu.memory_space<vmem>>, vector<2x32xf32>
    %cst = arith.constant dense<0.000000e+00> : vector<2x32xf32>
    %5 = vector.multi_reduction <add>, %3, %cst [2] : vector<2x32x128xf32> to vector<2x32xf32>
    %6 = arith.addf %4, %5 : vector<2x32xf32>
    %c0_5 = arith.constant 0 : index
    %c0_6 = arith.constant 0 : index
    %7 = vector.load %arg8[%c0_5, %c0_6] : memref<2x32xf32, #tpu.memory_space<vmem>>, vector<2x32xf32>
    tpu.vector_store %arg8[%c0_5, %c0_6], %6 {strides = array<i32>} : memref<2x32xf32, #tpu.memory_space<vmem>>, vector<2x32xf32>,
    %c0_7 = arith.constant 0 : index
    %c0_8 = arith.constant 0 : index
    %8 = vector.load %arg9[%c0_7, %c0_8] : memref<2x32xf32, #tpu.memory_space<vmem>>, vector<2x32xf32>
    %cst_9 = arith.constant dense<0xFF800000> : vector<2x32xf32>
    %9 = vector.multi_reduction <maximumf>, %3, %cst_9 [2] : vector<2x32x128xf32> to vector<2x32xf32>
    %10 = arith.maximumf %8, %9 : vector<2x32xf32>
    %c0_10 = arith.constant 0 : index
    %c0_11 = arith.constant 0 : index
    %11 = vector.load %arg9[%c0_10, %c0_11] : memref<2x32xf32, #tpu.memory_space<vmem>>, vector<2x32xf32>
    tpu.vector_store %arg9[%c0_10, %c0_11], %10 {strides = array<i32>} : memref<2x32xf32, #tpu.memory_space<vmem>>, vector<2x32xf32>,
    %c1_i32 = arith.constant 1 : i32
    %12 = arith.cmpi eq, %arg1, %c1_i32 : i32
    %13 = arith.extui %12 : i1 to i32
    %c0_i32_12 = arith.constant 0 : i32
    %14 = arith.cmpi ne, %13, %c0_i32_12 : i32
    scf.if %14 {
      %c0_13 = arith.constant 0 : index
      %c0_14 = arith.constant 0 : index
      %15 = vector.load %arg8[%c0_13, %c0_14] : memref<2x32xf32, #tpu.memory_space<vmem>>, vector<2x32xf32>
      %cst_15 = arith.constant 3.906250e-03 : f32
      %16 = vector.broadcast %cst_15 : f32 to vector<2x32xf32>
      %17 = arith.mulf %15, %16 : vector<2x32xf32>
      %c0_16 = arith.constant 0 : index
      %c0_17 = arith.constant 0 : index
      %18 = vector.load %arg9[%c0_16, %c0_17] : memref<2x32xf32, #tpu.memory_space<vmem>>, vector<2x32xf32>
      %c0_18 = arith.constant 0 : index
      %c0_19 = arith.constant 0 : index
      %19 = vector.load %arg3[%c0_18, %c0_19] : memref<32x128xf32, #tpu.memory_space<vmem>>, vector<32x128xf32>
      %c0_20 = arith.constant 0 : index
      %c0_21 = arith.constant 0 : index
      %20 = vector.load %arg4[%c0_20, %c0_21] : memref<1x128xf32, #tpu.memory_space<vmem>>, vector<1x128xf32>
      %c0_22 = arith.constant 0 : index
      %c0_23 = arith.constant 0 : index
      %21 = vector.load %arg5[%c0_22, %c0_23] : memref<128x32xf32, #tpu.memory_space<vmem>>, vector<128x32xf32>
      %c0_24 = arith.constant 0 : index
      %c0_25 = arith.constant 0 : index
      %22 = vector.load %arg6[%c0_24, %c0_25] : memref<1x32xf32, #tpu.memory_space<vmem>>, vector<1x32xf32>
      %23 = tpu.concatenate %17, %18 in 0 : vector<2x32xf32>, vector<2x32xf32> -> vector<4x32xf32>
      %cst_26 = arith.constant dense<0.000000e+00> : vector<4x128xf32>
      %24 = tpu.matmul %23, %19, %cst_26 {dimension_numbers = #tpu.dot_dimension_numbers<[1], [0], [0], [1], [0, 0, 1, 1], [], []>} : vector<4x32xf32>, vector<32x128xf32>, vector<4x128xf32> -> vector<4x128xf32>
      %25 = vector.broadcast %20 : vector<1x128xf32> to vector<4x128xf32>
      %26 = arith.addf %24, %25 : vector<4x128xf32>
      %cst_27 = arith.constant 0.000000e+00 : f32
      %27 = vector.broadcast %cst_27 : f32 to vector<4x128xf32>
      %28 = arith.maximumf %26, %27 : vector<4x128xf32>
      %29 = vector.extract_strided_slice %28 {offsets = [0, 0], sizes = [2, 128], strides = [1, 1]} : vector<4x128xf32> to vector<2x128xf32>
      %30 = vector.extract_strided_slice %28 {offsets = [2, 0], sizes = [2, 128], strides = [1, 1]} : vector<4x128xf32> to vector<2x128xf32>
      %31 = arith.addf %29, %30 : vector<2x128xf32>
      %cst_28 = arith.constant dense<0.000000e+00> : vector<2x32xf32>
      %32 = tpu.matmul %31, %21, %cst_28 {dimension_numbers = #tpu.dot_dimension_numbers<[1], [0], [0], [1], [0, 0, 1, 1], [], []>} : vector<2x128xf32>, vector<128x32xf32>, vector<2x32xf32> -> vector<2x32xf32>
      %cst_29 = arith.constant 2.000000e+00 : f32
      %33 = vector.broadcast %cst_29 : f32 to vector<1x32xf32>
      %34 = arith.mulf %33, %22 : vector<1x32xf32>
      %35 = vector.broadcast %34 : vector<1x32xf32> to vector<2x32xf32>
      %36 = arith.addf %32, %35 : vector<2x32xf32>
      %37 = arith.negf %36 : vector<2x32xf32>
      %38 = math.exp %37 : vector<2x32xf32>
      %cst_30 = arith.constant 1.000000e+00 : f32
      %39 = vector.broadcast %cst_30 : f32 to vector<2x32xf32>
      %40 = arith.addf %39, %38 : vector<2x32xf32>
      %41 = arith.divf %39, %40 : vector<2x32xf32>
      %c0_31 = arith.constant 0 : index
      %c0_32 = arith.constant 0 : index
      %42 = vector.load %arg7[%c0_31, %c0_32] : memref<2x32xf32, #tpu.memory_space<vmem>>, vector<2x32xf32>
      tpu.vector_store %arg7[%c0_31, %c0_32], %41 {strides = array<i32>} : memref<2x32xf32, #tpu.memory_space<vmem>>, vector<2x32xf32>,
    } else {
    }
    return
  }
  func.func @transform_0(%arg0: i32, %arg1: i32) -> (i32, i32, i32) {
    %c0_i32 = arith.constant 0 : i32
    %c0_i32_0 = arith.constant 0 : i32
    return %arg0, %c0_i32, %arg1 : i32, i32, i32
  }
  func.func @transform_1(%arg0: i32, %arg1: i32) -> (i32, i32) {
    %c0_i32 = arith.constant 0 : i32
    %c0_i32_0 = arith.constant 0 : i32
    %c0_i32_1 = arith.constant 0 : i32
    return %c0_i32, %c0_i32_0 : i32, i32
  }
  func.func @transform_2(%arg0: i32, %arg1: i32) -> (i32, i32) {
    %c0_i32 = arith.constant 0 : i32
    %c0_i32_0 = arith.constant 0 : i32
    %c0_i32_1 = arith.constant 0 : i32
    return %c0_i32, %c0_i32_0 : i32, i32
  }
  func.func @transform_3(%arg0: i32, %arg1: i32) -> (i32, i32) {
    %c0_i32 = arith.constant 0 : i32
    %c0_i32_0 = arith.constant 0 : i32
    %c0_i32_1 = arith.constant 0 : i32
    return %c0_i32, %c0_i32_0 : i32, i32
  }
  func.func @transform_4(%arg0: i32, %arg1: i32) -> (i32, i32) {
    %c0_i32 = arith.constant 0 : i32
    %c0_i32_0 = arith.constant 0 : i32
    %c0_i32_1 = arith.constant 0 : i32
    return %c0_i32, %c0_i32_0 : i32, i32
  }
  func.func @transform_5(%arg0: i32, %arg1: i32) -> (i32, i32) {
    %c0_i32 = arith.constant 0 : i32
    %c0_i32_0 = arith.constant 0 : i32
    return %arg0, %c0_i32 : i32, i32
  }
}

</mosaic_0001>

<llo_original>
// kernel: tpu_custom_call.1
$region0: #{tpu_custom_call.1}
  #allocation0 [shape = 'u32[]', space=smem, size = 0x4, offset = 0x4, fixed_abs, tag = 'smem constant byte address 0x4 - core index']
  #allocation1 [shape = 'u32[144,128]{1,0:T(1,128)}', space=vmem, size = 0x12000, scoped, tag = 'internal scratch']
  #allocation2 [shape = 'f32[2,32]{1,0:T(2,128)}', space=vmem, size = 0x400, scoped, tag = 'scratch operand']
  #allocation3 [shape = 'f32[2,32]{1,0:T(2,128)}', space=vmem, size = 0x400, scoped, tag = 'scratch operand']
  %s0 = inlined_call_operand.vmem [shape: f32[2,32,256], index: 0, kind: input, shape index: {}]
  %s1 = inlined_call_operand.vmem [shape: f32[32,128], index: 1, kind: input, shape index: {}]
  %s2 = inlined_call_operand.vmem [shape: f32[1,128], index: 2, kind: input, shape index: {}]
  %s3 = inlined_call_operand.vmem [shape: f32[128,32], index: 3, kind: input, shape index: {}]
  %s4 = inlined_call_operand.vmem [shape: f32[1,32], index: 4, kind: input, shape index: {}]
  %s5 = inlined_call_operand.hbm [shape: f32[2,32], index: 5, kind: output, shape index: {}]
  %s6 = sld [smem:[#allocation0]]
  $region99: #{tpu_custom_call.1} parent=0
    _
  %s8 = ssub.s32 1, %s6
  %s9 = scalar_select 0, %s8, %s6
  $region1: #{tpu_custom_call.1} parent=0
    #allocation4 [shape = 'u8[65536]{0}', space=vmem, size = 0x10000, scoped, tag = 'input window, operand 0']
    #allocation5 [shape = 'u8[1024]{0}', space=vmem, size = 0x400, scoped, tag = 'output window, operand 0, single buffered']
    #allocation6 [shape = 's32[2]{0}', space=sflag, size = 0x8, scoped, tag = 'scoped memory for tpu_custom_call.1']
    %10 = vsyncpa [#allocation6], 0
    loop: start=0, step=1, limit=4
    $region2: #{tpu_custom_call.1} parent=1 // loop_pre_header
      _
    $region3: #{tpu_custom_call.1} parent=1 // loop_header
      %s12 = sphi 0, %s16
      %p13 = scmp.ge.s32.totalorder %s12, 4
      %s19 = sphi 0, %s31
      %s20 = sphi 0, %s27
      %s21 = sphi 0, %s19
      %s22 = sphi 0, %s20
      %s23 = sphi 0, %s21
      %s24 = sphi 0, %s22
      %s36 = sphi 0, %s38
      %s39 = sphi 0, %s36
      %s40 = sphi 0, %s39
      %s56 = sphi 0, %s40
      %s60 = sphi 0, %s60
      %s62 = sphi 0, %s60
      %s63 = sphi 0, %s62
      %s77 = sphi 0, %s63
      %s81 = sphi 0, %s81
      %s83 = sphi 0, %s81
      %s84 = sphi 0, %s83
      %s98 = sphi 0, %s84
      %s102 = sphi 0, %s102
      %s104 = sphi 0, %s102
      %s105 = sphi 0, %s104
      %s119 = sphi 0, %s105
      %s123 = sphi 0, %s123
      %s125 = sphi 0, %s123
      %s126 = sphi 0, %s125
      %s140 = sphi 0, %s126
      %s146 = sphi 0, %s148
      %s149 = sphi 0, %s146
      %s150 = sphi 0, %s149
      %s166 = sphi 0, %s150
    $region4: #{tpu_custom_call.1} parent=1 // loop_header_branch
      %15 = sbr.rel (%p13) target = $region8
    $region5: #{tpu_custom_call.1} parent=1 // loop_body
      %s17 = ssub.s32 %s12, 1
      %s18 = ssub.s32 %s12, 2
      %s25 = sadd.s32 1, %s20
      %p26 = scmp.ge.s32.totalorder %s25, 2
      %s27 = scalar_select %p26, 0, %s25
      %s28 = sadd.s32 1, %s19
      %s29 = scalar_select %p26, %s28, %s19
      %p30 = scmp.ge.s32.totalorder %s29, 1
      %s31 = scalar_select %p30, 0, %s29
      %s32 = ssub.s32 %s19, %s31
      %s33 = ssub.s32 %s20, %s27
      %s34 = sor.u32 %s32, %s33
      %p35 = scmp.eq.s32.totalorder %s34, 0
      %s37 = sadd.s32 %s36, 1
      %s38 = scalar_select %p35, %s36, %s37
      %p41 = pneg %p35
      %p42 = scmp.eq.s32.totalorder %s12, 1
      %p43 = por %p41, %p42
      %p44 = scmp.ne.s32.totalorder %s36, %s39
      %p45 = scmp.eq.s32.totalorder %s12, 0
      %p46 = por %p44, %p45
      %p47 = scmp.ne.s32.totalorder %s36, %s39
      %p48 = scmp.eq.s32.totalorder %s17, 1
      %p49 = por %p47, %p48
      %p50 = scmp.ne.s32.totalorder %s39, %s40
      %p51 = scmp.eq.s32.totalorder %s17, 0
      %p52 = por %p50, %p51
      %p53 = scmp.ne.s32.totalorder %s39, %s40
      %p54 = scmp.eq.s32.totalorder %s18, 1
      %p55 = por %p53, %p54
      %p57 = scmp.ne.s32.totalorder %s40, %s56
      %p58 = scmp.eq.s32.totalorder %s18, 0
      %p59 = por %p57, %p58
      %s61 = sadd.s32 %s60, 1
      %p64 = scmp.eq.s32.totalorder %s12, 1
      %p65 = scmp.ne.s32.totalorder %s60, %s62
      %p66 = scmp.eq.s32.totalorder %s12, 0
      %p67 = por %p65, %p66
      %p68 = scmp.ne.s32.totalorder %s60, %s62
      %p69 = scmp.eq.s32.totalorder %s17, 1
      %p70 = por %p68, %p69
      %p71 = scmp.ne.s32.totalorder %s62, %s63
      %p72 = scmp.eq.s32.totalorder %s17, 0
      %p73 = por %p71, %p72
      %p74 = scmp.ne.s32.totalorder %s62, %s63
      %p75 = scmp.eq.s32.totalorder %s18, 1
      %p76 = por %p74, %p75
      %p78 = scmp.ne.s32.totalorder %s63, %s77
      %p79 = scmp.eq.s32.totalorder %s18, 0
      %p80 = por %p78, %p79
      %s82 = sadd.s32 %s81, 1
      %p85 = scmp.eq.s32.totalorder %s12, 1
      %p86 = scmp.ne.s32.totalorder %s81, %s83
      %p87 = scmp.eq.s32.totalorder %s12, 0
      %p88 = por %p86, %p87
      %p89 = scmp.ne.s32.totalorder %s81, %s83
      %p90 = scmp.eq.s32.totalorder %s17, 1
      %p91 = por %p89, %p90
      %p92 = scmp.ne.s32.totalorder %s83, %s84
      %p93 = scmp.eq.s32.totalorder %s17, 0
      %p94 = por %p92, %p93
      %p95 = scmp.ne.s32.totalorder %s83, %s84
      %p96 = scmp.eq.s32.totalorder %s18, 1
      %p97 = por %p95, %p96
      %p99 = scmp.ne.s32.totalorder %s84, %s98
      %p100 = scmp.eq.s32.totalorder %s18, 0
      %p101 = por %p99, %p100
      %s103 = sadd.s32 %s102, 1
      %p106 = scmp.eq.s32.totalorder %s12, 1
      %p107 = scmp.ne.s32.totalorder %s102, %s104
      %p108 = scmp.eq.s32.totalorder %s12, 0
      %p109 = por %p107, %p108
      %p110 = scmp.ne.s32.totalorder %s102, %s104
      %p111 = scmp.eq.s32.totalorder %s17, 1
      %p112 = por %p110, %p111
      %p113 = scmp.ne.s32.totalorder %s104, %s105
      %p114 = scmp.eq.s32.totalorder %s17, 0
      %p115 = por %p113, %p114
      %p116 = scmp.ne.s32.totalorder %s104, %s105
      %p117 = scmp.eq.s32.totalorder %s18, 1
      %p118 = por %p116, %p117
      %p120 = scmp.ne.s32.totalorder %s105, %s119
      %p121 = scmp.eq.s32.totalorder %s18, 0
      %p122 = por %p120, %p121
      %s124 = sadd.s32 %s123, 1
      %p127 = scmp.eq.s32.totalorder %s12, 1
      %p128 = scmp.ne.s32.totalorder %s123, %s125
      %p129 = scmp.eq.s32.totalorder %s12, 0
      %p130 = por %p128, %p129
      %p131 = scmp.ne.s32.totalorder %s123, %s125
      %p132 = scmp.eq.s32.totalorder %s17, 1
      %p133 = por %p131, %p132
      %p134 = scmp.ne.s32.totalorder %s125, %s126
      %p135 = scmp.eq.s32.totalorder %s17, 0
      %p136 = por %p134, %p135
      %p137 = scmp.ne.s32.totalorder %s125, %s126
      %p138 = scmp.eq.s32.totalorder %s18, 1
      %p139 = por %p137, %p138
      %p141 = scmp.ne.s32.totalorder %s126, %s140
      %p142 = scmp.eq.s32.totalorder %s18, 0
      %p143 = por %p141, %p142
      %s144 = ssub.s32 %s19, %s31
      %p145 = scmp.eq.s32.totalorder %s144, 0
      %s147 = sadd.s32 %s146, 1
      %s148 = scalar_select %p145, %s146, %s147
      %p151 = pneg %p145
      %p152 = scmp.eq.s32.totalorder %s12, 1
      %p153 = por %p151, %p152
      %p154 = scmp.ne.s32.totalorder %s146, %s149
      %p155 = scmp.eq.s32.totalorder %s12, 0
      %p156 = por %p154, %p155
      %p157 = scmp.ne.s32.totalorder %s146, %s149
      %p158 = scmp.eq.s32.totalorder %s17, 1
      %p159 = por %p157, %p158
      %p160 = scmp.ne.s32.totalorder %s149, %s150
      %p161 = scmp.eq.s32.totalorder %s17, 0
      %p162 = por %p160, %p161
      %p163 = scmp.ne.s32.totalorder %s149, %s150
      %p164 = scmp.eq.s32.totalorder %s18, 1
      %p165 = por %p163, %p164
      %p167 = scmp.ne.s32.totalorder %s150, %s166
      %p168 = scmp.eq.s32.totalorder %s18, 0
      %p169 = por %p167, %p168
      %p170 = scmp.le.s32.totalorder 1, %s12
      %p171 = scmp.lt.s32.totalorder %s12, 3
      %p172 = pnand %p170, %p171
      %p173 = pneg %p172
      // Predicated region
      $region9: #{tpu_custom_call.1} parent=5 // pred_check
        _
      $region10: #{tpu_custom_call.1} parent=5 // pred_check_branch
        %175 = sbr.rel (%p172) target = $region12
      $region11: #{tpu_custom_call.1} parent=5 // pred_region
        %s176 = ssub.s32 %s12, 1
        // Predicated region
        $region13: #{tpu_custom_call.1} parent=11 // pred_check
          %p177 = pneg %p73
        $region14: #{tpu_custom_call.1} parent=11 // pred_check_branch
          %179 = sbr.rel (%p177) target = $region16
        $region15: #{tpu_custom_call.1} parent=11 // pred_region
          _
        $region16: #{tpu_custom_call.1} parent=11 // pred_fallthru
          _
        // Predicated region
        $region17: #{tpu_custom_call.1} parent=11 // pred_check
          %p180 = pneg %p94
        $region18: #{tpu_custom_call.1} parent=11 // pred_check_branch
          %182 = sbr.rel (%p180) target = $region20
        $region19: #{tpu_custom_call.1} parent=11 // pred_region
          _
        $region20: #{tpu_custom_call.1} parent=11 // pred_fallthru
          _
        // Predicated region
        $region21: #{tpu_custom_call.1} parent=11 // pred_check
          %p183 = pneg %p115
        $region22: #{tpu_custom_call.1} parent=11 // pred_check_branch
          %185 = sbr.rel (%p183) target = $region24
        $region23: #{tpu_custom_call.1} parent=11 // pred_region
          _
        $region24: #{tpu_custom_call.1} parent=11 // pred_fallthru
          _
        // Predicated region
        $region25: #{tpu_custom_call.1} parent=11 // pred_check
          %p186 = pneg %p136
        $region26: #{tpu_custom_call.1} parent=11 // pred_check_branch
          %188 = sbr.rel (%p186) target = $region28
        $region27: #{tpu_custom_call.1} parent=11 // pred_region
          _
        $region28: #{tpu_custom_call.1} parent=11 // pred_fallthru
          _
      $region12: #{tpu_custom_call.1} parent=5 // pred_fallthru
        _
      %p189 = scmp.lt.s32.totalorder %s12, 2
      // Predicated region
      $region29: #{tpu_custom_call.1} parent=5 // pred_check
        %p190 = pneg %p189
      $region30: #{tpu_custom_call.1} parent=5 // pred_check_branch
        %192 = sbr.rel (%p190) target = $region32
      $region31: #{tpu_custom_call.1} parent=5 // pred_region
        // Predicated region
        $region33: #{tpu_custom_call.1} parent=31 // pred_check
          %p193 = pneg %p46
        $region34: #{tpu_custom_call.1} parent=31 // pred_check_branch
          %195 = sbr.rel (%p193) target = $region36
        $region35: #{tpu_custom_call.1} parent=31 // pred_region
          %s196 = sand.u32 %s36, 1
          %s197 = sand.u32 %s36, 1
          %s198 = smul.addr %s197, 64
          %s199 = scalar_lea.vmem [#allocation4], %s198
          %s200 = smul.u32 2, %s19
          %s201 = smul.addr %s200, 8
          %s202 = sadd.s32 %s20, %s201
          %s203 = smul.addr %s202, 8
          %s204 = scalar_lea.vmem %s0, %s203
          // Predicated region
          $region37: #{tpu_custom_call.1} parent=35 // pred_check
            _
          $region38: #{tpu_custom_call.1} parent=35 // pred_check_branch
            %206 = sbr.rel (0) target = $region40
          $region39: #{tpu_custom_call.1} parent=35 // pred_region
            // Predicated region
            $region41: #{tpu_custom_call.1} parent=39 // pred_check
              _
            $region42: #{tpu_custom_call.1} parent=39 // pred_check_branch
              %208 = sbr.rel (0) target = $region44
            $region43: #{tpu_custom_call.1} parent=39 // pred_region
              // Predicated region
              $region56: #{tpu_custom_call.1} parent=43 // pred_check
                _
              $region57: #{tpu_custom_call.1} parent=43 // pred_check_branch
                %238 = sbr.rel (0) target = $region59
              $region58: #{tpu_custom_call.1} parent=43 // pred_region
                loop: start=0, step=1, limit=1
                $region60: #{tpu_custom_call.1} parent=58 // loop_pre_header
                  _
                $region61: #{tpu_custom_call.1} parent=58 // loop_header
                  %s240 = sphi 0, %s244
                  %p241 = scmp.ge.s32.totalorder %s240, 1
                  %s245 = sphi %s204, %s204
                  %s246 = sphi %s199, %s199
                $region62: #{tpu_custom_call.1} parent=58 // loop_header_branch
                  %243 = sbr.rel (%p241) target = $region66
                $region63: #{tpu_custom_call.1} parent=58 // loop_body
                  %v247 = vld [vmem:[%s245] sm:$0xff]
                  %248 = vst [vmem:[%s246] sm:$0xff] %v247
                  %v249 = vld [vmem:[%s245 + $0x10] sm:$0xff]
                  %250 = vst [vmem:[%s246 + $0x8] sm:$0xff] %v249
                  %v251 = vld [vmem:[%s245 + $0x20] sm:$0xff]
                  %252 = vst [vmem:[%s246 + $0x10] sm:$0xff] %v251
                  %v253 = vld [vmem:[%s245 + $0x30] sm:$0xff]
                  %254 = vst [vmem:[%s246 + $0x18] sm:$0xff] %v253
                  %v255 = vld [vmem:[%s245 + $0x40] sm:$0xff]
                  %256 = vst [vmem:[%s246 + $0x20] sm:$0xff] %v255
                  %v257 = vld [vmem:[%s245 + $0x50] sm:$0xff]
                  %258 = vst [vmem:[%s246 + $0x28] sm:$0xff] %v257
                  %v259 = vld [vmem:[%s245 + $0x60] sm:$0xff]
                  %260 = vst [vmem:[%s246 + $0x30] sm:$0xff] %v259
                  %v261 = vld [vmem:[%s245 + $0x70] sm:$0xff]
                  %262 = vst [vmem:[%s246 + $0x38] sm:$0xff] %v261
                $region64: #{tpu_custom_call.1} parent=58 // loop_footer
                  %s244 = sadd.s32 1, %s240
                $region65: #{tpu_custom_call.1} parent=58 // loop_footer_branch
                  %239 = sbr.rel target = $region61
                $region66: #{tpu_custom_call.1} parent=58 // loop_exit
                  _
              $region59: #{tpu_custom_call.1} parent=43 // pred_fallthru
                _
              // Predicated region
              $region67: #{tpu_custom_call.1} parent=43 // pred_check
                _
              $region68: #{tpu_custom_call.1} parent=43 // pred_check_branch
                %264 = sbr.rel target = $region70
              $region69: #{tpu_custom_call.1} parent=43 // pred_region
                _
              $region70: #{tpu_custom_call.1} parent=43 // pred_fallthru
                _
            $region44: #{tpu_custom_call.1} parent=39 // pred_fallthru
              _
            // Predicated region
            $region45: #{tpu_custom_call.1} parent=39 // pred_check
              _
            $region46: #{tpu_custom_call.1} parent=39 // pred_check_branch
              %210 = sbr.rel target = $region48
            $region47: #{tpu_custom_call.1} parent=39 // pred_region
              %s212 = ssub.s32 256, 1
              loop: start=0, step=1, limit=1
              $region49: #{tpu_custom_call.1} parent=47 // loop_pre_header
                _
              $region50: #{tpu_custom_call.1} parent=47 // loop_header
                %s214 = sphi 0, %s218
                %p215 = scmp.ge.s32.totalorder %s214, 1
                %s219 = sphi %s204, %s204
                %s220 = sphi %s199, %s199
              $region51: #{tpu_custom_call.1} parent=47 // loop_header_branch
                %217 = sbr.rel (%p215) target = $region55
              $region52: #{tpu_custom_call.1} parent=47 // loop_body
                %v221 = vld [vmem:[%s219] sm:%s212]
                %222 = vst [vmem:[%s220] sm:%s212] %v221
                %v223 = vld [vmem:[%s219 + $0x10] sm:%s212]
                %224 = vst [vmem:[%s220 + $0x8] sm:%s212] %v223
                %v225 = vld [vmem:[%s219 + $0x20] sm:%s212]
                %226 = vst [vmem:[%s220 + $0x10] sm:%s212] %v225
                %v227 = vld [vmem:[%s219 + $0x30] sm:%s212]
                %228 = vst [vmem:[%s220 + $0x18] sm:%s212] %v227
                %v229 = vld [vmem:[%s219 + $0x40] sm:%s212]
                %230 = vst [vmem:[%s220 + $0x20] sm:%s212] %v229
                %v231 = vld [vmem:[%s219 + $0x50] sm:%s212]
                %232 = vst [vmem:[%s220 + $0x28] sm:%s212] %v231
                %v233 = vld [vmem:[%s219 + $0x60] sm:%s212]
                %234 = vst [vmem:[%s220 + $0x30] sm:%s212] %v233
                %v235 = vld [vmem:[%s219 + $0x70] sm:%s212]
                %236 = vst [vmem:[%s220 + $0x38] sm:%s212] %v235
              $region53: #{tpu_custom_call.1} parent=47 // loop_footer
                %s218 = sadd.s32 1, %s214
              $region54: #{tpu_custom_call.1} parent=47 // loop_footer_branch
                %213 = sbr.rel target = $region50
              $region55: #{tpu_custom_call.1} parent=47 // loop_exit
                _
            $region48: #{tpu_custom_call.1} parent=39 // pred_fallthru
              _
          $region40: #{tpu_custom_call.1} parent=35 // pred_fallthru
            _
          %265 = vnop
        $region36: #{tpu_custom_call.1} parent=31 // pred_fallthru
          _
      $region32: #{tpu_custom_call.1} parent=5 // pred_fallthru
        _
      %p266 = scmp.le.s32.totalorder 1, %s12
      %p267 = scmp.lt.s32.totalorder %s12, 3
      %p268 = pnand %p266, %p267
      %p269 = pneg %p268
      // Predicated region
      $region71: #{tpu_custom_call.1} parent=5 // pred_check
        _
      $region72: #{tpu_custom_call.1} parent=5 // pred_check_branch
        %271 = sbr.rel (%p268) target = $region74
      $region73: #{tpu_custom_call.1} parent=5 // pred_region
        %s272 = ssub.s32 %s12, 1
        %s273 = sand.u32 %s39, 1
        %s274 = sand.u32 %s39, 1
        %s275 = smul.addr %s274, 64
        %s276 = scalar_lea.vmem [#allocation4], %s275
        // Predicated region
        $region75: #{tpu_custom_call.1} parent=73 // pred_check
          %p277 = pneg %p52
        $region76: #{tpu_custom_call.1} parent=73 // pred_check_branch
          %279 = sbr.rel (%p277) target = $region78
        $region77: #{tpu_custom_call.1} parent=73 // pred_region
          _
        $region78: #{tpu_custom_call.1} parent=73 // pred_fallthru
          _
        %s280 = sand.u32 %s39, 1
        %s281 = sand.u32 %s39, 1
        %s282 = smul.addr %s281, 64
        %s283 = scalar_lea.vmem [#allocation4], %s282
        %p284 = pneg %p52
        %p285 = pneg %p49
        %p286 = pneg %p73
        %p287 = pneg %p70
        %p288 = pneg %p94
        %p289 = pneg %p91
        %p290 = pneg %p115
        %p291 = pneg %p112
        %p292 = pneg %p136
        %p293 = pneg %p133
        %p294 = pneg %p162
        %p295 = pneg %p159
        %s296 = smul.u32 2, %s21
        %p297 = scmp.eq.s32.totalorder %s22, 0
        // Predicated region
        $region79: #{tpu_custom_call.1} parent=73 // pred_check
          %p298 = pneg %p297
        $region80: #{tpu_custom_call.1} parent=73 // pred_check_branch
          %300 = sbr.rel (%p298) target = $region82
        $region81: #{tpu_custom_call.1} parent=73 // pred_region
          %vm301 = vcmask 254976
          %302 = vst.msk [vmem:[#allocation2] sm:$0x3] %vm301, 0.0
          %303 = vst.msk [vmem:[#allocation3] sm:$0x3] %vm301, -inf
        $region82: #{tpu_custom_call.1} parent=73 // pred_fallthru
          _
        %v304 = vld [vmem:[%s276] sm:$0xff]
        %v305 = vld [vmem:[%s276 + $0x8] sm:$0xff]
        %v306 = vld [vmem:[%s276 + $0x10] sm:$0xff]
        %v307 = vld [vmem:[%s276 + $0x18] sm:$0xff]
        %v308 = vld [vmem:[%s276 + $0x20] sm:$0xff]
        %v309 = vld [vmem:[%s276 + $0x28] sm:$0xff]
        %v310 = vld [vmem:[%s276 + $0x30] sm:$0xff]
        %v311 = vld [vmem:[%s276 + $0x38] sm:$0xff]
        %v312 = vld [vmem:[#allocation2] sm:$0x3]
        %313 = vadd.xlane.f32.xlu0 %v304
        %v314 = vpop.xlane.xlu0 %313
        %315 = vadd.xlane.f32.xlu0 %v305
        %v316 = vpop.xlane.xlu0 %315
        %317 = vadd.xlane.f32.xlu0 %v306
        %v318 = vpop.xlane.xlu0 %317
        %319 = vadd.xlane.f32.xlu0 %v307
        %v320 = vpop.xlane.xlu0 %319
        %321 = vadd.xlane.f32.xlu0 %v308
        %v322 = vpop.xlane.xlu0 %321
        %323 = vadd.xlane.f32.xlu0 %v309
        %v324 = vpop.xlane.xlu0 %323
        %325 = vadd.xlane.f32.xlu0 %v310
        %v326 = vpop.xlane.xlu0 %325
        %327 = vadd.xlane.f32.xlu0 %v311
        %v328 = vpop.xlane.xlu0 %327
        %v337 = vlaneseq
        %v338 = vand.u32 %v337, 127
        %v339 = vlaneseq
        %v340 = vshrl.u32 %v339, 7
        %v341 = vsub.s32 %v338, %v340
        %v342 = vrot.slane %v314, %v341
        %v343 = vadd.s32 %v338, 4294967288
        %v344 = vlaneseq
        %v345 = vshrl.u32 %v344, 7
        %v346 = vsub.s32 %v343, %v345
        %v347 = vrot.slane %v316, %v346
        %vm348 = vcmask 130112
        %v349 = vsel %vm348, %v347, %v342
        %v350 = vadd.s32 %v338, 4294967280
        %v351 = vlaneseq
        %v352 = vshrl.u32 %v351, 7
        %v353 = vsub.s32 %v350, %v352
        %v354 = vrot.slane %v318, %v353
        %vm355 = vcmask 195712
        %v356 = vsel %vm355, %v354, %v349
        %v357 = vadd.s32 %v338, 4294967272
        %v358 = vlaneseq
        %v359 = vshrl.u32 %v358, 7
        %v360 = vsub.s32 %v357, %v359
        %v361 = vrot.slane %v320, %v360
        %vm362 = vcmask 261312
        %v363 = vsel %vm362, %v361, %v356
        %v364 = vlaneseq
        %v365 = vshrl.u32 %v364, 7
        %v366 = vsub.s32 %v338, %v365
        %v367 = vrot.slane %v322, %v366
        %v368 = vlaneseq
        %v369 = vshrl.u32 %v368, 7
        %v370 = vsub.s32 %v343, %v369
        %v371 = vrot.slane %v324, %v370
        %v372 = vsel %vm348, %v371, %v367
        %v373 = vlaneseq
        %v374 = vshrl.u32 %v373, 7
        %v375 = vsub.s32 %v350, %v374
        %v376 = vrot.slane %v326, %v375
        %v377 = vsel %vm355, %v376, %v372
        %v378 = vlaneseq
        %v379 = vshrl.u32 %v378, 7
        %v380 = vsub.s32 %v357, %v379
        %v381 = vrot.slane %v328, %v380
        %v382 = vsel %vm362, %v381, %v377
        %vm383 = vcmask 1041409
        %v384 = vsel %vm383, %v382, %v363
        %v386 = vadd.f32 %v312, %v384
        %vm387 = vcmask 254976
        %388 = vst.msk [vmem:[#allocation2] sm:$0x3] %vm387, %v386
        %v389 = vld [vmem:[#allocation3] sm:$0x3]
        %390 = vmax.xlane.f32.xlu0 %v304
        %v391 = vpop.xlane.xlu0 %390
        %392 = vmax.xlane.f32.xlu0 %v305
        %v393 = vpop.xlane.xlu0 %392
        %394 = vmax.xlane.f32.xlu0 %v306
        %v395 = vpop.xlane.xlu0 %394
        %396 = vmax.xlane.f32.xlu0 %v307
        %v397 = vpop.xlane.xlu0 %396
        %398 = vmax.xlane.f32.xlu0 %v308
        %v399 = vpop.xlane.xlu0 %398
        %400 = vmax.xlane.f32.xlu0 %v309
        %v401 = vpop.xlane.xlu0 %400
        %402 = vmax.xlane.f32.xlu0 %v310
        %v403 = vpop.xlane.xlu0 %402
        %404 = vmax.xlane.f32.xlu0 %v311
        %v405 = vpop.xlane.xlu0 %404
        %v414 = vlaneseq
        %v415 = vshrl.u32 %v414, 7
        %v416 = vsub.s32 %v338, %v415
        %v417 = vrot.slane %v391, %v416
        %v418 = vlaneseq
        %v419 = vshrl.u32 %v418, 7
        %v420 = vsub.s32 %v343, %v419
        %v421 = vrot.slane %v393, %v420
        %v422 = vsel %vm348, %v421, %v417
        %v423 = vlaneseq
        %v424 = vshrl.u32 %v423, 7
        %v425 = vsub.s32 %v350, %v424
        %v426 = vrot.slane %v395, %v425
        %v427 = vsel %vm355, %v426, %v422
        %v428 = vlaneseq
        %v429 = vshrl.u32 %v428, 7
        %v430 = vsub.s32 %v357, %v429
        %v431 = vrot.slane %v397, %v430
        %v432 = vsel %vm362, %v431, %v427
        %v433 = vlaneseq
        %v434 = vshrl.u32 %v433, 7
        %v435 = vsub.s32 %v338, %v434
        %v436 = vrot.slane %v399, %v435
        %v437 = vlaneseq
        %v438 = vshrl.u32 %v437, 7
        %v439 = vsub.s32 %v343, %v438
        %v440 = vrot.slane %v401, %v439
        %v441 = vsel %vm348, %v440, %v436
        %v442 = vlaneseq
        %v443 = vshrl.u32 %v442, 7
        %v444 = vsub.s32 %v350, %v443
        %v445 = vrot.slane %v403, %v444
        %v446 = vsel %vm355, %v445, %v441
        %v447 = vlaneseq
        %v448 = vshrl.u32 %v447, 7
        %v449 = vsub.s32 %v357, %v448
        %v450 = vrot.slane %v405, %v449
        %v451 = vsel %vm362, %v450, %v446
        %v452 = vsel %vm383, %v451, %v432
        %v454 = vmax.f32 %v389, %v452
        %455 = vst.msk [vmem:[#allocation3] sm:$0x3] %vm387, %v454
        %p456 = scmp.eq.s32.totalorder %s22, 1
        // Predicated region
        $region83: #{tpu_custom_call.1} parent=73 // pred_check
          %p457 = pneg %p456
        $region84: #{tpu_custom_call.1} parent=73 // pred_check_branch
          %459 = sbr.rel (%p457) target = $region86
        $region85: #{tpu_custom_call.1} parent=73 // pred_region
          %v460 = vld [vmem:[#allocation2] sm:$0x3]
          %v461 = vmul.f32 %v460, 0.00390625
          %v462 = vld [vmem:[#allocation3] sm:$0x3]
          %v463 = vld [vmem:[%s1] sm:$0xff]
          %v464 = vld [vmem:[%s1 + $0x8] sm:$0xff]
          %v465 = vld [vmem:[%s1 + $0x10] sm:$0xff]
          %v466 = vld [vmem:[%s1 + $0x18] sm:$0xff]
          %v467 = vld [vmem:[%s2] sm:$0x1]
          %v468 = vld [vmem:[%s3] sm:$0xff]
          %v469 = vld [vmem:[%s3 + $0x8] sm:$0xff]
          %v470 = vld [vmem:[%s3 + $0x10] sm:$0xff]
          %v471 = vld [vmem:[%s3 + $0x18] sm:$0xff]
          %v472 = vld [vmem:[%s3 + $0x20] sm:$0xff]
          %v473 = vld [vmem:[%s3 + $0x28] sm:$0xff]
          %v474 = vld [vmem:[%s3 + $0x30] sm:$0xff]
          %v475 = vld [vmem:[%s3 + $0x38] sm:$0xff]
          %v476 = vld [vmem:[%s3 + $0x40] sm:$0xff]
          %v477 = vld [vmem:[%s3 + $0x48] sm:$0xff]
          %v478 = vld [vmem:[%s3 + $0x50] sm:$0xff]
          %v479 = vld [vmem:[%s3 + $0x58] sm:$0xff]
          %v480 = vld [vmem:[%s3 + $0x60] sm:$0xff]
          %v481 = vld [vmem:[%s3 + $0x68] sm:$0xff]
          %v482 = vld [vmem:[%s3 + $0x70] sm:$0xff]
          %v483 = vld [vmem:[%s3 + $0x78] sm:$0xff]
          %v484 = vld [vmem:[%s4] sm:$0x1]
          %v486 = vrot.slane %v462, 6
          %vm488 = vcmask 1041408
          %v489 = vsel %vm488, %v461, %v486
          %v491 = vlaneseq
          %v492 = vshrl.u32 %v491, 7
          %v493 = vsub.s32 0, %v492
          %v494 = vrot.slane %v467, %v493
          %vm496 = vcmask 261120
          %v498 = vsel %vm496, %v489, 0
          %500 = vmatprep.subr.mxu0 0.0
          %501 = vmatpush1.msra.mxu0 0.0
          %502 = vmatprep.subr.mxu0 0.0
          %503 = vmatpush1.msra.mxu0 0.0
          %504 = vmatprep.subr.mxu0 0.0
          %505 = vmatpush1.msra.mxu0 0.0
          %506 = vmatprep.subr.mxu0 0.0
          %507 = vmatpush1.msra.mxu0 0.0
          %508 = vmatprep.subr.mxu0 0.0
          %509 = vmatpush1.msra.mxu0 0.0
          %510 = vmatprep.subr.mxu0 0.0
          %511 = vmatpush1.msra.mxu0 0.0
          %512 = vmatprep.subr.mxu0 0.0
          %513 = vmatpush1.msra.mxu0 0.0
          %514 = vmatprep.subr.mxu0 0.0
          %515 = vmatpush1.msra.mxu0 0.0
          %516 = vmatprep.subr.mxu0 0.0
          %517 = vmatpush1.msra.mxu0 0.0
          %518 = vmatprep.subr.mxu0 0.0
          %519 = vmatpush1.msra.mxu0 0.0
          %520 = vmatprep.subr.mxu0 0.0
          %521 = vmatpush1.msra.mxu0 0.0
          %522 = vmatprep.subr.mxu0 0.0
          %523 = vmatpush1.msra.mxu0 0.0
          %524 = vmatprep.subr.mxu0 0.0
          %525 = vmatpush1.msra.mxu0 %v466
          %526 = vmatprep.subr.mxu0 0.0
          %527 = vmatpush1.msra.mxu0 %v465
          %528 = vmatprep.subr.mxu0 0.0
          %529 = vmatpush1.msra.mxu0 %v464
          %530 = vmatprep.subr.mxu0 0.0
          %531 = vmatpush1.msra.mxu0 %v463
          %532 = vmatprep.subr.mxu0 0.0
          %533 = vmatpush2.msra.mxu0 0.0
          %534 = vmatprep.subr.mxu0 0.0
          %535 = vmatpush2.msra.mxu0 0.0
          %536 = vmatprep.subr.mxu0 0.0
          %537 = vmatpush2.msra.mxu0 0.0
          %538 = vmatprep.subr.mxu0 0.0
          %539 = vmatpush2.msra.mxu0 0.0
          %540 = vmatprep.subr.mxu0 0.0
          %541 = vmatpush2.msra.mxu0 0.0
          %542 = vmatprep.subr.mxu0 0.0
          %543 = vmatpush2.msra.mxu0 0.0
          %544 = vmatprep.subr.mxu0 0.0
          %545 = vmatpush2.msra.mxu0 0.0
          %546 = vmatprep.subr.mxu0 0.0
          %547 = vmatpush2.msra.mxu0 0.0
          %548 = vmatprep.subr.mxu0 0.0
          %549 = vmatpush2.msra.mxu0 0.0
          %550 = vmatprep.subr.mxu0 0.0
          %551 = vmatpush2.msra.mxu0 0.0
          %552 = vmatprep.subr.mxu0 0.0
          %553 = vmatpush2.msra.mxu0 0.0
          %554 = vmatprep.subr.mxu0 0.0
          %555 = vmatpush2.msra.mxu0 0.0
          %556 = vmatprep.subr.mxu0 0.0
          %557 = vmatpush2.msra.mxu0 0.0
          %558 = vmatprep.subr.mxu0 0.0
          %559 = vmatpush2.msra.mxu0 0.0
          %560 = vmatprep.subr.mxu0 0.0
          %561 = vmatpush2.msra.mxu0 0.0
          %562 = vmatprep.subr.mxu0 0.0
          %563 = vmatpush2.msra.mxu0 0.0
          %564 = vmatprep.mubr.f32.mxu0 0.0
          %565 = vmatmul.mubr.f32.gmra.mxu0 %v498
          %v566 = vpop.f32.mrf.mxu0
          %v567 = vadd.f32 %v494, %v566
          %v568 = vpop.f32.mrf.mxu0
          %569 = vdwg.mxu0
          %v570 = vmax.f32 %v567, 0.0
          %v572 = vrot.slane %v570, 2
          %v574 = vadd.f32 %v570, %v572
          %v575 = vmul.f32 %v484, 2.0
          %v577 = vlaneseq
          %v578 = vshrl.u32 %v577, 7
          %v579 = vsub.s32 0, %v578
          %v580 = vrot.slane %v575, %v579
          %582 = vmatprep.subr.mxu0 0.0
          %583 = vmatpush1.msra.mxu0 %v483
          %584 = vmatprep.subr.mxu0 0.0
          %585 = vmatpush1.msra.mxu0 %v482
          %586 = vmatprep.subr.mxu0 0.0
          %587 = vmatpush1.msra.mxu0 %v481
          %588 = vmatprep.subr.mxu0 0.0
          %589 = vmatpush1.msra.mxu0 %v480
          %590 = vmatprep.subr.mxu0 0.0
          %591 = vmatpush1.msra.mxu0 %v479
          %592 = vmatprep.subr.mxu0 0.0
          %593 = vmatpush1.msra.mxu0 %v478
          %594 = vmatprep.subr.mxu0 0.0
          %595 = vmatpush1.msra.mxu0 %v477
          %596 = vmatprep.subr.mxu0 0.0
          %597 = vmatpush1.msra.mxu0 %v476
          %598 = vmatprep.subr.mxu0 0.0
          %599 = vmatpush1.msra.mxu0 %v475
          %600 = vmatprep.subr.mxu0 0.0
          %601 = vmatpush1.msra.mxu0 %v474
          %602 = vmatprep.subr.mxu0 0.0
          %603 = vmatpush1.msra.mxu0 %v473
          %604 = vmatprep.subr.mxu0 0.0
          %605 = vmatpush1.msra.mxu0 %v472
          %606 = vmatprep.subr.mxu0 0.0
          %607 = vmatpush1.msra.mxu0 %v471
          %608 = vmatprep.subr.mxu0 0.0
          %609 = vmatpush1.msra.mxu0 %v470
          %610 = vmatprep.subr.mxu0 0.0
          %611 = vmatpush1.msra.mxu0 %v469
          %612 = vmatprep.subr.mxu0 0.0
          %613 = vmatpush1.msra.mxu0 %v468
          %614 = vmatprep.subr.mxu0 0.0
          %615 = vmatpush2.msra.mxu0 0.0
          %616 = vmatprep.subr.mxu0 0.0
          %617 = vmatpush2.msra.mxu0 0.0
          %618 = vmatprep.subr.mxu0 0.0
          %619 = vmatpush2.msra.mxu0 0.0
          %620 = vmatprep.subr.mxu0 0.0
          %621 = vmatpush2.msra.mxu0 0.0
          %622 = vmatprep.subr.mxu0 0.0
          %623 = vmatpush2.msra.mxu0 0.0
          %624 = vmatprep.subr.mxu0 0.0
          %625 = vmatpush2.msra.mxu0 0.0
          %626 = vmatprep.subr.mxu0 0.0
          %627 = vmatpush2.msra.mxu0 0.0
          %628 = vmatprep.subr.mxu0 0.0
          %629 = vmatpush2.msra.mxu0 0.0
          %630 = vmatprep.subr.mxu0 0.0
          %631 = vmatpush2.msra.mxu0 0.0
          %632 = vmatprep.subr.mxu0 0.0
          %633 = vmatpush2.msra.mxu0 0.0
          %634 = vmatprep.subr.mxu0 0.0
          %635 = vmatpush2.msra.mxu0 0.0
          %636 = vmatprep.subr.mxu0 0.0
          %637 = vmatpush2.msra.mxu0 0.0
          %638 = vmatprep.subr.mxu0 0.0
          %639 = vmatpush2.msra.mxu0 0.0
          %640 = vmatprep.subr.mxu0 0.0
          %641 = vmatpush2.msra.mxu0 0.0
          %642 = vmatprep.subr.mxu0 0.0
          %643 = vmatpush2.msra.mxu0 0.0
          %644 = vmatprep.subr.mxu0 0.0
          %645 = vmatpush2.msra.mxu0 0.0
          %646 = vmatprep.mubr.f32.mxu0 0.0
          %647 = vmatmul.mubr.f32.gmra.mxu0 %v574
          %v648 = vpop.f32.mrf.mxu0
          %v649 = vadd.f32 %v580, %v648
          %v650 = vpop.f32.mrf.mxu0
          %651 = vdwg.mxu0
          %v652 = vxor.u32 %v649, 2147483648
          %v653 = vmul.f32 %v652, 1.442695
          %v654 = vpow.pop %v653
          %v655 = vadd.f32 %v654, 1.0
          %v656 = vrcp.pop %v655
          %v657 = vmul.f32 1.0, %v656
          %658 = vst.msk [vmem:[#allocation5] sm:$0x3] %vm387, %v657
        $region86: #{tpu_custom_call.1} parent=73 // pred_fallthru
          _
        // Predicated region
        $region87: #{tpu_custom_call.1} parent=73 // pred_check
          %p659 = pneg %p159
        $region88: #{tpu_custom_call.1} parent=73 // pred_check_branch
          %661 = sbr.rel (%p659) target = $region90
        $region89: #{tpu_custom_call.1} parent=73 // pred_region
          %s663 = ssub.s32 32, 32
          %664 = vsyncadd [#allocation6], %s663
          %s665 = smul.addr %s21, 32
          %s666 = scalar_lea.hbm %s5, %s665
          %s668 = sshll.u32 [#allocation5], 4
          %s669 = int_to_ptr.vmem [resolvable:$true] %s668
          %671 = dma.vmem_to_hbm [thread:$0]  %s669, 32, %s666, [#allocation6]
        $region90: #{tpu_custom_call.1} parent=73 // pred_fallthru
          _
        // Predicated region
        $region91: #{tpu_custom_call.1} parent=73 // pred_check
          %p672 = pneg %p159
        $region92: #{tpu_custom_call.1} parent=73 // pred_check_branch
          %674 = sbr.rel (%p672) target = $region94
        $region93: #{tpu_custom_call.1} parent=73 // pred_region
          %675 = dma.done [#allocation6], 32
        $region94: #{tpu_custom_call.1} parent=73 // pred_fallthru
          _
      $region74: #{tpu_custom_call.1} parent=5 // pred_fallthru
        _
      %p676 = scmp.le.s32.totalorder 2, %s12
      // Predicated region
      $region95: #{tpu_custom_call.1} parent=5 // pred_check
        %p677 = pneg %p676
      $region96: #{tpu_custom_call.1} parent=5 // pred_check_branch
        %679 = sbr.rel (%p677) target = $region98
      $region97: #{tpu_custom_call.1} parent=5 // pred_region
        %s680 = ssub.s32 %s12, 2
      $region98: #{tpu_custom_call.1} parent=5 // pred_fallthru
        _
    $region6: #{tpu_custom_call.1} parent=1 // loop_footer
      %s16 = sadd.s32 1, %s12
    $region7: #{tpu_custom_call.1} parent=1 // loop_footer_branch
      %11 = sbr.rel target = $region3
    $region8: #{tpu_custom_call.1} parent=1 // loop_exit
      _
    %681 = vsyncpa [#allocation6], 1
    %s682 = scalar_lea.sflag [#allocation6], 1
    %683 = vsyncpa %s682, 1

</llo_original>
